<compile_context>
chip_gen: v5e
topology: v5e:2x2
jax: 0.10.0
libtpu: 0.0.40
codegen_flags: <defaults>
</compile_context>

<pallas_src>
from typing import NamedTuple

import jax
import jax.numpy as jnp
from jax.experimental import pallas as pl
from jax.experimental.pallas import tpu as pltpu


# ----------------------------------------------------------------------------
# Kernel
# ----------------------------------------------------------------------------
def _sfu_kernel(x_ref, f_ref, wx_ref, wf_ref, b_ref, o_ref):
    # One fused MXU pass over the packed tiles:
    #   z = x_packed @ W_x + f_packed @ W_f + bias      # (tm, 2*p*H) f32
    x = x_ref[...]                                               # (tm, p*H)
    z = (jnp.dot(x, wx_ref[...], preferred_element_type=jnp.float32)
         + jnp.dot(f_ref[...], wf_ref[...], preferred_element_type=jnp.float32)
         + b_ref[...])
    hw = x.shape[-1]            # p*H; == 128 when packed -> slice on a lane boundary
    r = jnp.tanh(z[:, :hw])                                      # EUP
    g = jax.nn.sigmoid(z[:, hw:])                                # EUP
    # o = g*r + (1-g)*x == x + g*(r - x)   (one fewer VPU multiply)
    o_ref[...] = (x + g * (r - x)).astype(o_ref.dtype)


# ----------------------------------------------------------------------------
# One-time parameter preparation (hoisted out of the per-call path)
# ----------------------------------------------------------------------------
def _block_diag(w, p):
    """(din, dout) -> block-diagonal (p*din, p*dout); identity for p == 1."""
    if p == 1:
        return w
    din, dout = w.shape
    out = jnp.zeros((p * din, p * dout), w.dtype)
    for i in range(p):
        out = out.at[i * din:(i + 1) * din, i * dout:(i + 1) * dout].set(w)
    return out


class SFUParams(NamedTuple):
    w_x: jax.Array       # (p*H, 2*p*H): [r-blocks | g-blocks], multiplies packed x
    w_f: jax.Array       # (p*F, 2*p*H): same, multiplies packed fusions
    bias: jax.Array      # (1,   2*p*H)
    pack: int
    input_size: int
    fusion_size: int


def prepare_sfu_params(w_r, b_r, w_g, b_g, *, pack=None):
    """Fuse the two nn.Linear weights into packed, lane-dense kernel operands.

    w_r / w_g: (H, H+F) torch nn.Linear layout (out_features, in_features).
    pack p (rows packed per VMEM row) defaults to 128 // H when H divides 128.
    """
    H, Din = w_r.shape
    Fdim = Din - H
    assert w_g.shape == (H, Din), "weight shape mismatch"
    assert b_r.shape == (H,) and b_g.shape == (H,), "bias shape mismatch"
    if pack is None:
        pack = 128 // H if (H < 128 and 128 % H == 0) else 1
    p = int(pack)

    wrx, wrf = w_r[:, :H].T, w_r[:, H:].T          # (H, H), (F, H)
    wgx, wgf = w_g[:, :H].T, w_g[:, H:].T
    # Columns: [p r-blocks | p g-blocks] so the in-kernel r/g split is at p*H.
    w_x = jnp.concatenate([_block_diag(wrx, p), _block_diag(wgx, p)], axis=1)
    w_f = jnp.concatenate([_block_diag(wrf, p), _block_diag(wgf, p)], axis=1)
    bias = jnp.concatenate([jnp.tile(b_r, p), jnp.tile(b_g, p)]).reshape(1, 2 * p * H)
    return SFUParams(w_x, w_f, bias, p, H, Fdim)


# ----------------------------------------------------------------------------
# Forward
# ----------------------------------------------------------------------------
def _vmem_budget_bytes():
    """~75% of physical VMEM per TensorCore; conservative v7x fallback."""
    try:
        phys = int(pltpu.get_tpu_info().vmem_capacity_bytes)
    except Exception:
        phys = 64 << 20
    return (phys * 3) // 4


def sfu_forward(x, fusions, params: SFUParams, *, tile_m=None):
    """x: (B, S, H) f32, fusions: (B, S, F) f32, params from prepare_sfu_params."""
    B, S, H = x.shape
    Fdim = fusions.shape[-1]
    assert params.input_size == H and params.fusion_size == Fdim, "param/input mismatch"
    p = params.pack
    M = B * S
    if M % p:
        raise ValueError(f"B*S={M} must be divisible by pack={p}; "
                         "use prepare_sfu_params(..., pack=1)")
    Mp = M // p
    HW, FW = p * H, p * Fdim

    xp = x.reshape(Mp, HW)            # lane-dense slabs (=128 wide when packed)
    fp = fusions.reshape(Mp, FW)

    # ---- VMEM budget / tile selection (generation aware) --------------------
    granule = 8                                       # sublane multiple (packed rows)
    row_bytes = (HW + FW + HW) * 4                    # x + fusions in, o out, per packed row
    wgt_bytes = int(params.w_x.size + params.w_f.size + params.bias.size) * 4
    budget = _vmem_budget_bytes()
    # Single-buffer the grid-invariant weights/bias once double-buffering them
    # would cost real VMEM (guarded; irrelevant at small H).
    single_buf_w = (2 * wgt_bytes) > (4 << 20)
    resident = wgt_bytes * (1 if single_buf_w else 2)
    act_budget = max(budget - resident - (4 << 20), 2 << 20)

    if tile_m is None:
        tgt = max((4 << 20) // row_bytes, granule)            # >= ~4 MiB HBM per step
        cap = max(act_budget // (2 * row_bytes), granule)     # double-buffered tiles fit
        tm_p = max((min(tgt, cap) // granule) * granule, granule)
        if Mp <= tm_p:
            # Whole problem fits one step: split in two for megacore (v7x) when
            # each half still moves >= ~1 MiB, else take a single full block.
            half = -(-Mp // 2)
            half = -(-half // granule) * granule
            if Mp >= 4 * granule and half * row_bytes >= (1 << 20):
                tm_p = half
            else:
                tm_p = Mp
    else:
        tm_p = -(-int(tile_m) // p)                   # user tile (original rows) -> packed rows
        if tm_p >= Mp:
            tm_p = Mp
        else:
            tm_p = max(granule, (-(-tm_p // granule)) * granule)  # round up: valid block

    grid = (pl.cdiv(Mp, tm_p),)

    vmem_need = 2 * tm_p * row_bytes + resident + (4 << 20)   # dbl-buffered acts + weights + slack
    vmem_limit = int(min(max(vmem_need, 16 << 20), budget))

    cost = pl.CostEstimate(
        flops=2 * Mp * (HW + FW) * (2 * HW),
        transcendentals=2 * M * H,
        bytes_accessed=4 * (M * (2 * H + Fdim)) + wgt_bytes,
    )

    wkw = dict(pipeline_mode=pl.Buffered(1)) if single_buf_w else {}

    out = pl.pallas_call(
        _sfu_kernel,
        out_shape=jax.ShapeDtypeStruct((Mp, HW), x.dtype),
        grid_spec=pltpu.PrefetchScalarGridSpec(
            num_scalar_prefetch=0,
            grid=grid,
            in_specs=[
                pl.BlockSpec((tm_p, HW), lambda i: (i, 0)),           # packed x rows
                pl.BlockSpec((tm_p, FW), lambda i: (i, 0)),           # packed fusion rows
                pl.BlockSpec((HW, 2 * HW), lambda i: (0, 0), **wkw),  # W_x (resident)
                pl.BlockSpec((FW, 2 * HW), lambda i: (0, 0), **wkw),  # W_f (resident)
                pl.BlockSpec((1, 2 * HW), lambda i: (0, 0), **wkw),   # fused bias
            ],
            out_specs=pl.BlockSpec((tm_p, HW), lambda i: (i, 0)),
        ),
        compiler_params=pltpu.CompilerParams(
            dimension_semantics=("parallel",),
            vmem_limit_bytes=vmem_limit,
        ),
        cost_estimate=cost,
    )(xp, fp, params.w_x, params.w_f, params.bias)

    return out.reshape(B, S, H)


# ----------------------------------------------------------------------------
# Reference + demo
# ----------------------------------------------------------------------------
def sfu_reference(x, fusions, w_r, b_r, w_g, b_g):
    rf = jnp.concatenate([x, fusions], axis=-1)
    r = jnp.tanh(rf @ w_r.T + b_r)
    g = jax.nn.sigmoid(rf @ w_g.T + b_g)
    return g * r + (1.0 - g) * x


def _make_params(key, input_size, fusion_size):
    Din = input_size + fusion_size
    kwr, kbr, kwg, kbg = jax.random.split(key, 4)
    bound = 1.0 / (Din ** 0.5)
    w_r = jax.random.uniform(kwr, (input_size, Din), jnp.float32, -bound, bound)
    b_r = jax.random.uniform(kbr, (input_size,), jnp.float32, -bound, bound)
    w_g = jax.random.uniform(kwg, (input_size, Din), jnp.float32, -bound, bound)
    b_g = jax.random.uniform(kbg, (input_size,), jnp.float32, -bound, bound)
    return w_r, b_r, w_g, b_g


if __name__ == "__main__":
    input_size, fusion_size = 32, 32

    key = jax.random.PRNGKey(0)
    kx, kf, kp, kx2, kf2, kx3, kf3 = jax.random.split(key, 7)
    w_r, b_r, w_g, b_g = _make_params(kp, input_size, fusion_size)

    # Hoisted, one-time weight prep (reused across calls).
    params_packed = prepare_sfu_params(w_r, b_r, w_g, b_g)          # pack = 128//32 = 4
    params_unpacked = prepare_sfu_params(w_r, b_r, w_g, b_g, pack=1)

    # Case 1: small shape, single full block, lane-dense packed path.
    B, S = 2, 8
    x = jax.random.normal(kx, (B, S, input_size), dtype=jnp.float32)
    f = jax.random.normal(kf, (B, S, fusion_size), dtype=jnp.float32)
    out = sfu_forward(x, f, params_packed)
    jax.block_until_ready(out)
    ref = sfu_reference(x, f, w_r, b_r, w_g, b_g)
    assert out.shape == (B, S, input_size)
    assert jnp.allclose(out, ref, atol=1e-5, rtol=1e-5)

    # Case 2: multi-step grid with a ragged tail (M=400 rows, tile_m=192 -> 3 steps).
    B2, S2 = 4, 100
    x2 = jax.random.normal(kx2, (B2, S2, input_size), dtype=jnp.float32)
    f2 = jax.random.normal(kf2, (B2, S2, fusion_size), dtype=jnp.float32)
    out2 = sfu_forward(x2, f2, params_packed, tile_m=192)
    jax.block_until_ready(out2)
    ref2 = sfu_reference(x2, f2, w_r, b_r, w_g, b_g)
    assert out2.shape == (B2, S2, input_size)
    assert jnp.allclose(out2, ref2, atol=1e-5, rtol=1e-5)

    # Case 3: unpacked fallback path (pack=1), e.g. for odd row counts.
    B3, S3 = 3, 7
    x3 = jax.random.normal(kx3, (B3, S3, input_size), dtype=jnp.float32)
    f3 = jax.random.normal(kf3, (B3, S3, fusion_size), dtype=jnp.float32)
    out3 = sfu_forward(x3, f3, params_unpacked)
    jax.block_until_ready(out3)
    ref3 = sfu_reference(x3, f3, w_r, b_r, w_g, b_g)
    assert out3.shape == (B3, S3, input_size)
    assert jnp.allclose(out3, ref3, atol=1e-5, rtol=1e-5)

    print("KERNEL_OK")
</pallas_src>

<mosaic_0001>
module attributes {stable_mosaic.version = 11 : i64} {
  func.func @_sfu_kernel(%arg0: i32, %arg1: memref<4x128xf32, #tpu.memory_space<vmem>>, %arg2: memref<4x128xf32, #tpu.memory_space<vmem>>, %arg3: memref<128x256xf32, #tpu.memory_space<vmem>>, %arg4: memref<128x256xf32, #tpu.memory_space<vmem>>, %arg5: memref<1x256xf32, #tpu.memory_space<vmem>>, %arg6: memref<4x128xf32, #tpu.memory_space<vmem>>) attributes {dimension_semantics = [#tpu.dimension_semantics<parallel>], iteration_bounds = array<i64: 1>, scalar_prefetch = 0 : i64, scratch_operands = 0 : i64, tpu.core_type = #tpu.core_type<tc>, window_params = [{transform_indices = @transform_0, window_bounds = array<i64: 4, 128>}, {transform_indices = @transform_1, window_bounds = array<i64: 4, 128>}, {pipeline_mode = #tpu.pipeline_mode<synchronous>, transform_indices = @transform_2, window_bounds = array<i64: 128, 256>}, {pipeline_mode = #tpu.pipeline_mode<synchronous>, transform_indices = @transform_3, window_bounds = array<i64: 128, 256>}, {pipeline_mode = #tpu.pipeline_mode<synchronous>, transform_indices = @transform_4, window_bounds = array<i64: 1, 256>}, {transform_indices = @transform_5, window_bounds = array<i64: 4, 128>}]} {
    %c0 = arith.constant 0 : index
    %c0_0 = arith.constant 0 : index
    %0 = vector.load %arg1[%c0, %c0_0] : memref<4x128xf32, #tpu.memory_space<vmem>>, vector<4x128xf32>
    %c0_1 = arith.constant 0 : index
    %c0_2 = arith.constant 0 : index
    %1 = vector.load %arg3[%c0_1, %c0_2] : memref<128x256xf32, #tpu.memory_space<vmem>>, vector<128x256xf32>
    %cst = arith.constant dense<0.000000e+00> : vector<4x256xf32>
    %2 = tpu.matmul %0, %1, %cst {dimension_numbers = #tpu.dot_dimension_numbers<[1], [0], [0], [1], [0, 0, 1, 1], [], []>} : vector<4x128xf32>, vector<128x256xf32>, vector<4x256xf32> -> vector<4x256xf32>
    %c0_3 = arith.constant 0 : index
    %c0_4 = arith.constant 0 : index
    %3 = vector.load %arg2[%c0_3, %c0_4] : memref<4x128xf32, #tpu.memory_space<vmem>>, vector<4x128xf32>
    %c0_5 = arith.constant 0 : index
    %c0_6 = arith.constant 0 : index
    %4 = vector.load %arg4[%c0_5, %c0_6] : memref<128x256xf32, #tpu.memory_space<vmem>>, vector<128x256xf32>
    %cst_7 = arith.constant dense<0.000000e+00> : vector<4x256xf32>
    %5 = tpu.matmul %3, %4, %cst_7 {dimension_numbers = #tpu.dot_dimension_numbers<[1], [0], [0], [1], [0, 0, 1, 1], [], []>} : vector<4x128xf32>, vector<128x256xf32>, vector<4x256xf32> -> vector<4x256xf32>
    %6 = arith.addf %2, %5 : vector<4x256xf32>
    %c0_8 = arith.constant 0 : index
    %c0_9 = arith.constant 0 : index
    %7 = vector.load %arg5[%c0_8, %c0_9] : memref<1x256xf32, #tpu.memory_space<vmem>>, vector<1x256xf32>
    %8 = vector.broadcast %7 : vector<1x256xf32> to vector<4x256xf32>
    %9 = arith.addf %6, %8 : vector<4x256xf32>
    %10 = vector.extract_strided_slice %9 {offsets = [0, 0], sizes = [4, 128], strides = [1, 1]} : vector<4x256xf32> to vector<4x128xf32>
    %11 = math.tanh %10 : vector<4x128xf32>
    %12 = vector.extract_strided_slice %9 {offsets = [0, 128], sizes = [4, 128], strides = [1, 1]} : vector<4x256xf32> to vector<4x128xf32>
    %13 = arith.negf %12 : vector<4x128xf32>
    %14 = math.exp %13 : vector<4x128xf32>
    %cst_10 = arith.constant 1.000000e+00 : f32
    %15 = vector.broadcast %cst_10 : f32 to vector<4x128xf32>
    %16 = arith.addf %15, %14 : vector<4x128xf32>
    %17 = arith.divf %15, %16 : vector<4x128xf32>
    %18 = arith.subf %11, %0 : vector<4x128xf32>
    %19 = arith.mulf %17, %18 : vector<4x128xf32>
    %20 = arith.addf %0, %19 : vector<4x128xf32>
    %c0_11 = arith.constant 0 : index
    %c0_12 = arith.constant 0 : index
    %21 = vector.load %arg6[%c0_11, %c0_12] : memref<4x128xf32, #tpu.memory_space<vmem>>, vector<4x128xf32>
    tpu.vector_store %arg6[%c0_11, %c0_12], %20 {strides = array<i32>} : memref<4x128xf32, #tpu.memory_space<vmem>>, vector<4x128xf32>,
    return
  }
  func.func @transform_0(%arg0: i32) -> (i32, i32) {
    %c0_i32 = arith.constant 0 : i32
    %c0_i32_0 = arith.constant 0 : i32
    return %arg0, %c0_i32 : i32, i32
  }
  func.func @transform_1(%arg0: i32) -> (i32, i32) {
    %c0_i32 = arith.constant 0 : i32
    %c0_i32_0 = arith.constant 0 : i32
    return %arg0, %c0_i32 : i32, i32
  }
  func.func @transform_2(%arg0: i32) -> (i32, i32) {
    %c0_i32 = arith.constant 0 : i32
    %c0_i32_0 = arith.constant 0 : i32
    %c0_i32_1 = arith.constant 0 : i32
    return %c0_i32, %c0_i32_0 : i32, i32
  }
  func.func @transform_3(%arg0: i32) -> (i32, i32) {
    %c0_i32 = arith.constant 0 : i32
    %c0_i32_0 = arith.constant 0 : i32
    %c0_i32_1 = arith.constant 0 : i32
    return %c0_i32, %c0_i32_0 : i32, i32
  }
  func.func @transform_4(%arg0: i32) -> (i32, i32) {
    %c0_i32 = arith.constant 0 : i32
    %c0_i32_0 = arith.constant 0 : i32
    %c0_i32_1 = arith.constant 0 : i32
    return %c0_i32, %c0_i32_0 : i32, i32
  }
  func.func @transform_5(%arg0: i32) -> (i32, i32) {
    %c0_i32 = arith.constant 0 : i32
    %c0_i32_0 = arith.constant 0 : i32
    return %arg0, %c0_i32 : i32, i32
  }
}

</mosaic_0001>

<llo_original>
// kernel: tpu_custom_call.1
$region0: #{tpu_custom_call.1}
  #allocation0 [shape = 'u32[]', space=smem, size = 0x4, offset = 0x4, fixed_abs, tag = 'smem constant byte address 0x4 - core index']
  #allocation1 [shape = 'u32[72,128]{1,0:T(1,128)}', space=vmem, size = 0x9000, scoped, tag = 'internal scratch']
  %s0 = inlined_call_operand.hbm [shape: f32[4,128], index: 0, kind: input, shape index: {}]
  %s1 = inlined_call_operand.hbm [shape: f32[4,128], index: 1, kind: input, shape index: {}]
  %s2 = inlined_call_operand.hbm [shape: f32[128,256], index: 2, kind: input, shape index: {}]
  %s3 = inlined_call_operand.hbm [shape: f32[128,256], index: 3, kind: input, shape index: {}]
  %s4 = inlined_call_operand.vmem [shape: f32[1,256], index: 4, kind: input, shape index: {}]
  %s5 = inlined_call_operand.hbm [shape: f32[4,128], index: 5, kind: output, shape index: {}]
  %s6 = sld [smem:[#allocation0]]
  $region46: #{tpu_custom_call.1} parent=0
    _
  %s8 = ssub.s32 1, %s6
  %s9 = scalar_select 0, %s8, %s6
  $region1: #{tpu_custom_call.1} parent=0
    #allocation2 [shape = 'u8[2048]{0}', space=vmem, size = 0x800, scoped, tag = 'input window, operand 0, single buffered']
    #allocation3 [shape = 's32[1]{0}', space=sflag, size = 0x4, scoped, tag = 'scoped memory for tpu_custom_call.1']
    #allocation4 [shape = 's32[1]{0}', space=sflag, size = 0x4, scoped, tag = 'scoped memory for tpu_custom_call.1']
    #allocation5 [shape = 'u8[2048]{0}', space=vmem, size = 0x800, scoped, tag = 'input window, operand 1, single buffered']
    #allocation6 [shape = 's32[1]{0}', space=sflag, size = 0x4, scoped, tag = 'scoped memory for tpu_custom_call.1']
    #allocation7 [shape = 'u8[131072]{0}', space=vmem, size = 0x20000, scoped, tag = 'input window, operand 2, single buffered']
    #allocation8 [shape = 'u8[131072]{0}', space=vmem, size = 0x20000, scoped, tag = 'input window, operand 3, single buffered']
    #allocation9 [shape = 's32[1]{0}', space=sflag, size = 0x4, scoped, tag = 'scoped memory for tpu_custom_call.1']
    #allocation10 [shape = 'u8[2048]{0}', space=vmem, size = 0x800, scoped, tag = 'output window, operand 0, single buffered']
    %10 = vsyncpa [#allocation3], 0
    %11 = vsyncpa [#allocation6], 0
    %12 = vsyncpa [#allocation9], 0
    %13 = vsyncpa [#allocation4], 0
    // Predicated region
    $region2: #{tpu_custom_call.1} parent=1 // pred_check
      _
    $region3: #{tpu_custom_call.1} parent=1 // pred_check_branch
      %15 = sbr.rel (0) target = $region5
    $region4: #{tpu_custom_call.1} parent=1 // pred_region
      %17 = vsyncadd [#allocation3], 0
      %s19 = sshll.u32 %s0, 4
      %s20 = int_to_ptr.hbm [resolvable:$true] %s19
      %s21 = sshll.u32 [#allocation2], 4
      %s22 = int_to_ptr.vmem [resolvable:$true] %s21
      %24 = dma.hbm_to_vmem [thread:$0]  %s20, 64, %s22, [#allocation3]
    $region5: #{tpu_custom_call.1} parent=1 // pred_fallthru
      _
    // Predicated region
    $region6: #{tpu_custom_call.1} parent=1 // pred_check
      _
    $region7: #{tpu_custom_call.1} parent=1 // pred_check_branch
      %26 = sbr.rel (0) target = $region9
    $region8: #{tpu_custom_call.1} parent=1 // pred_region
      %28 = vsyncadd [#allocation6], 0
      %s30 = sshll.u32 %s1, 4
      %s31 = int_to_ptr.hbm [resolvable:$true] %s30
      %s32 = sshll.u32 [#allocation5], 4
      %s33 = int_to_ptr.vmem [resolvable:$true] %s32
      %35 = dma.hbm_to_vmem [thread:$0]  %s31, 64, %s33, [#allocation6]
    $region9: #{tpu_custom_call.1} parent=1 // pred_fallthru
      _
    // Predicated region
    $region10: #{tpu_custom_call.1} parent=1 // pred_check
      _
    $region11: #{tpu_custom_call.1} parent=1 // pred_check_branch
      %37 = sbr.rel (0) target = $region13
    $region12: #{tpu_custom_call.1} parent=1 // pred_region
      %39 = vsyncadd [#allocation6], 0
      %s40 = sshll.u32 %s2, 4
      %s41 = int_to_ptr.hbm [resolvable:$true] %s40
      %s42 = sshll.u32 [#allocation7], 4
      %s43 = int_to_ptr.vmem [resolvable:$true] %s42
      %48 = dma.hbm_to_vmem [thread:$0]  %s41, 4096, %s43, [#allocation6], 256, 256, 16
    $region13: #{tpu_custom_call.1} parent=1 // pred_fallthru
      _
    // Predicated region
    $region14: #{tpu_custom_call.1} parent=1 // pred_check
      _
    $region15: #{tpu_custom_call.1} parent=1 // pred_check_branch
      %50 = sbr.rel (0) target = $region17
    $region16: #{tpu_custom_call.1} parent=1 // pred_region
      %52 = vsyncadd [#allocation9], 0
      %s53 = sshll.u32 %s3, 4
      %s54 = int_to_ptr.hbm [resolvable:$true] %s53
      %s55 = sshll.u32 [#allocation8], 4
      %s56 = int_to_ptr.vmem [resolvable:$true] %s55
      %61 = dma.hbm_to_vmem [thread:$0]  %s54, 4096, %s56, [#allocation9], 256, 256, 16
    $region17: #{tpu_custom_call.1} parent=1 // pred_fallthru
      _
    // Predicated region
    $region18: #{tpu_custom_call.1} parent=1 // pred_check
      _
    $region19: #{tpu_custom_call.1} parent=1 // pred_check_branch
      %63 = sbr.rel (0) target = $region21
    $region20: #{tpu_custom_call.1} parent=1 // pred_region
      _
    $region21: #{tpu_custom_call.1} parent=1 // pred_fallthru
      _
    // Predicated region
    $region22: #{tpu_custom_call.1} parent=1 // pred_check
      _
    $region23: #{tpu_custom_call.1} parent=1 // pred_check_branch
      %65 = sbr.rel (0) target = $region25
    $region24: #{tpu_custom_call.1} parent=1 // pred_region
      %67 = dma.done [#allocation3], 64
    $region25: #{tpu_custom_call.1} parent=1 // pred_fallthru
      _
    // Predicated region
    $region26: #{tpu_custom_call.1} parent=1 // pred_check
      _
    $region27: #{tpu_custom_call.1} parent=1 // pred_check_branch
      %69 = sbr.rel (0) target = $region29
    $region28: #{tpu_custom_call.1} parent=1 // pred_region
      %71 = dma.done [#allocation6], 64
    $region29: #{tpu_custom_call.1} parent=1 // pred_fallthru
      _
    // Predicated region
    $region30: #{tpu_custom_call.1} parent=1 // pred_check
      _
    $region31: #{tpu_custom_call.1} parent=1 // pred_check_branch
      %73 = sbr.rel (0) target = $region33
    $region32: #{tpu_custom_call.1} parent=1 // pred_region
      %75 = dma.done [#allocation6], 4096
    $region33: #{tpu_custom_call.1} parent=1 // pred_fallthru
      _
    // Predicated region
    $region34: #{tpu_custom_call.1} parent=1 // pred_check
      _
    $region35: #{tpu_custom_call.1} parent=1 // pred_check_branch
      %77 = sbr.rel (0) target = $region37
    $region36: #{tpu_custom_call.1} parent=1 // pred_region
      %79 = dma.done [#allocation9], 4096
    $region37: #{tpu_custom_call.1} parent=1 // pred_fallthru
      _
    %v80 = vld [vmem:[#allocation2] sm:$0xf]
    %v81 = vld [vmem:[#allocation7] sm:$0xff]
    %v82 = vld [vmem:[#allocation7 + $0x8] sm:$0xff]
    %v83 = vld [vmem:[#allocation7 + $0x10] sm:$0xff]
    %v84 = vld [vmem:[#allocation7 + $0x18] sm:$0xff]
    %v85 = vld [vmem:[#allocation7 + $0x20] sm:$0xff]
    %v86 = vld [vmem:[#allocation7 + $0x28] sm:$0xff]
    %v87 = vld [vmem:[#allocation7 + $0x30] sm:$0xff]
    %v88 = vld [vmem:[#allocation7 + $0x38] sm:$0xff]
    %v89 = vld [vmem:[#allocation7 + $0x40] sm:$0xff]
    %v90 = vld [vmem:[#allocation7 + $0x48] sm:$0xff]
    %v91 = vld [vmem:[#allocation7 + $0x50] sm:$0xff]
    %v92 = vld [vmem:[#allocation7 + $0x58] sm:$0xff]
    %v93 = vld [vmem:[#allocation7 + $0x60] sm:$0xff]
    %v94 = vld [vmem:[#allocation7 + $0x68] sm:$0xff]
    %v95 = vld [vmem:[#allocation7 + $0x70] sm:$0xff]
    %v96 = vld [vmem:[#allocation7 + $0x78] sm:$0xff]
    %v97 = vld [vmem:[#allocation7 + $0x80] sm:$0xff]
    %v98 = vld [vmem:[#allocation7 + $0x88] sm:$0xff]
    %v99 = vld [vmem:[#allocation7 + $0x90] sm:$0xff]
    %v100 = vld [vmem:[#allocation7 + $0x98] sm:$0xff]
    %v101 = vld [vmem:[#allocation7 + $0xa0] sm:$0xff]
    %v102 = vld [vmem:[#allocation7 + $0xa8] sm:$0xff]
    %v103 = vld [vmem:[#allocation7 + $0xb0] sm:$0xff]
    %v104 = vld [vmem:[#allocation7 + $0xb8] sm:$0xff]
    %v105 = vld [vmem:[#allocation7 + $0xc0] sm:$0xff]
    %v106 = vld [vmem:[#allocation7 + $0xc8] sm:$0xff]
    %v107 = vld [vmem:[#allocation7 + $0xd0] sm:$0xff]
    %v108 = vld [vmem:[#allocation7 + $0xd8] sm:$0xff]
    %v109 = vld [vmem:[#allocation7 + $0xe0] sm:$0xff]
    %v110 = vld [vmem:[#allocation7 + $0xe8] sm:$0xff]
    %v111 = vld [vmem:[#allocation7 + $0xf0] sm:$0xff]
    %v112 = vld [vmem:[#allocation7 + $0xf8] sm:$0xff]
    %v113 = vld [vmem:[#allocation5] sm:$0xf]
    %v114 = vld [vmem:[#allocation8] sm:$0xff]
    %v115 = vld [vmem:[#allocation8 + $0x8] sm:$0xff]
    %v116 = vld [vmem:[#allocation8 + $0x10] sm:$0xff]
    %v117 = vld [vmem:[#allocation8 + $0x18] sm:$0xff]
    %v118 = vld [vmem:[#allocation8 + $0x20] sm:$0xff]
    %v119 = vld [vmem:[#allocation8 + $0x28] sm:$0xff]
    %v120 = vld [vmem:[#allocation8 + $0x30] sm:$0xff]
    %v121 = vld [vmem:[#allocation8 + $0x38] sm:$0xff]
    %v122 = vld [vmem:[#allocation8 + $0x40] sm:$0xff]
    %v123 = vld [vmem:[#allocation8 + $0x48] sm:$0xff]
    %v124 = vld [vmem:[#allocation8 + $0x50] sm:$0xff]
    %v125 = vld [vmem:[#allocation8 + $0x58] sm:$0xff]
    %v126 = vld [vmem:[#allocation8 + $0x60] sm:$0xff]
    %v127 = vld [vmem:[#allocation8 + $0x68] sm:$0xff]
    %v128 = vld [vmem:[#allocation8 + $0x70] sm:$0xff]
    %v129 = vld [vmem:[#allocation8 + $0x78] sm:$0xff]
    %v130 = vld [vmem:[#allocation8 + $0x80] sm:$0xff]
    %v131 = vld [vmem:[#allocation8 + $0x88] sm:$0xff]
    %v132 = vld [vmem:[#allocation8 + $0x90] sm:$0xff]
    %v133 = vld [vmem:[#allocation8 + $0x98] sm:$0xff]
    %v134 = vld [vmem:[#allocation8 + $0xa0] sm:$0xff]
    %v135 = vld [vmem:[#allocation8 + $0xa8] sm:$0xff]
    %v136 = vld [vmem:[#allocation8 + $0xb0] sm:$0xff]
    %v137 = vld [vmem:[#allocation8 + $0xb8] sm:$0xff]
    %v138 = vld [vmem:[#allocation8 + $0xc0] sm:$0xff]
    %v139 = vld [vmem:[#allocation8 + $0xc8] sm:$0xff]
    %v140 = vld [vmem:[#allocation8 + $0xd0] sm:$0xff]
    %v141 = vld [vmem:[#allocation8 + $0xd8] sm:$0xff]
    %v142 = vld [vmem:[#allocation8 + $0xe0] sm:$0xff]
    %v143 = vld [vmem:[#allocation8 + $0xe8] sm:$0xff]
    %v144 = vld [vmem:[#allocation8 + $0xf0] sm:$0xff]
    %v145 = vld [vmem:[#allocation8 + $0xf8] sm:$0xff]
    %146 = vmatpush.msra.mxu0 %v144
    %147 = vmatpush.msra.mxu0 %v142
    %148 = vmatpush.msra.mxu0 %v140
    %149 = vmatpush.msra.mxu0 %v138
    %150 = vmatpush.msra.mxu0 %v136
    %151 = vmatpush.msra.mxu0 %v134
    %152 = vmatpush.msra.mxu0 %v132
    %153 = vmatpush.msra.mxu0 %v130
    %154 = vmatpush.msra.mxu0 %v128
    %155 = vmatpush.msra.mxu0 %v126
    %156 = vmatpush.msra.mxu0 %v124
    %157 = vmatpush.msra.mxu0 %v122
    %158 = vmatpush.msra.mxu0 %v120
    %159 = vmatpush.msra.mxu0 %v118
    %160 = vmatpush.msra.mxu0 %v116
    %161 = vmatpush.msra.mxu0 %v114
    %162 = vmatmul.f32.gmra.mxu0 %v113
    %v163 = vpop.f32.mrf.mxu0
    %v164 = vadd.f32 0.0, %v163
    %165 = vdwg.mxu0
    %166 = vmatpush.msra.mxu0 %v145
    %167 = vmatpush.msra.mxu0 %v143
    %168 = vmatpush.msra.mxu0 %v141
    %169 = vmatpush.msra.mxu0 %v139
    %170 = vmatpush.msra.mxu0 %v137
    %171 = vmatpush.msra.mxu0 %v135
    %172 = vmatpush.msra.mxu0 %v133
    %173 = vmatpush.msra.mxu0 %v131
    %174 = vmatpush.msra.mxu0 %v129
    %175 = vmatpush.msra.mxu0 %v127
    %176 = vmatpush.msra.mxu0 %v125
    %177 = vmatpush.msra.mxu0 %v123
    %178 = vmatpush.msra.mxu0 %v121
    %179 = vmatpush.msra.mxu0 %v119
    %180 = vmatpush.msra.mxu0 %v117
    %181 = vmatpush.msra.mxu0 %v115
    %182 = vmatmul.f32.gmra.mxu0 %v113
    %v183 = vpop.f32.mrf.mxu0
    %v184 = vadd.f32 0.0, %v183
    %185 = vdwg.mxu0
    %186 = vmatpush.msra.mxu0 %v111
    %187 = vmatpush.msra.mxu0 %v109
    %188 = vmatpush.msra.mxu0 %v107
    %189 = vmatpush.msra.mxu0 %v105
    %190 = vmatpush.msra.mxu0 %v103
    %191 = vmatpush.msra.mxu0 %v101
    %192 = vmatpush.msra.mxu0 %v99
    %193 = vmatpush.msra.mxu0 %v97
    %194 = vmatpush.msra.mxu0 %v95
    %195 = vmatpush.msra.mxu0 %v93
    %196 = vmatpush.msra.mxu0 %v91
    %197 = vmatpush.msra.mxu0 %v89
    %198 = vmatpush.msra.mxu0 %v87
    %199 = vmatpush.msra.mxu0 %v85
    %200 = vmatpush.msra.mxu0 %v83
    %201 = vmatpush.msra.mxu0 %v81
    %202 = vmatmul.f32.gmra.mxu0 %v80
    %v203 = vpop.f32.mrf.mxu0
    %v204 = vadd.f32 %v164, %v203
    %205 = vdwg.mxu0
    %206 = vmatpush.msra.mxu0 %v112
    %207 = vmatpush.msra.mxu0 %v110
    %208 = vmatpush.msra.mxu0 %v108
    %209 = vmatpush.msra.mxu0 %v106
    %210 = vmatpush.msra.mxu0 %v104
    %211 = vmatpush.msra.mxu0 %v102
    %212 = vmatpush.msra.mxu0 %v100
    %213 = vmatpush.msra.mxu0 %v98
    %214 = vmatpush.msra.mxu0 %v96
    %215 = vmatpush.msra.mxu0 %v94
    %216 = vmatpush.msra.mxu0 %v92
    %217 = vmatpush.msra.mxu0 %v90
    %218 = vmatpush.msra.mxu0 %v88
    %219 = vmatpush.msra.mxu0 %v86
    %220 = vmatpush.msra.mxu0 %v84
    %221 = vmatpush.msra.mxu0 %v82
    %222 = vmatmul.f32.gmra.mxu0 %v80
    %v223 = vpop.f32.mrf.mxu0
    %v224 = vadd.f32 %v184, %v223
    %225 = vdwg.mxu0
    %v226 = vld [vmem:[%s4] sm:$0x3]
    %v228 = vperm.slane %v226, 0
    %v229 = vperm.slane %v226, 1
    %v232 = vadd.f32 %v204, %v228
    %v233 = vadd.f32 %v224, %v229
    %v234 = vtanh.pop %v232
    %v235 = vxor.u32 %v233, 2147483648
    %v236 = vmul.f32 %v235, 1.442695
    %v237 = vpow.pop %v236
    %v238 = vadd.f32 %v237, 1.0
    %v239 = vrcp.pop %v238
    %v240 = vmul.f32 %v238, %v239
    %v241 = vsub.f32 1.0, %v240
    %v242 = vmul.f32 %v239, %v241
    %v243 = vadd.f32 %v239, %v242
    %vm244 = vweird.f32 %v238
    %vm245 = vweird.f32 %v239
    %vm246 = vmor %vm244, %vm245
    %v247 = vsel %vm246, %v239, %v243
    %v248 = vand.u32 2147483647, %v238
    %vm249 = vcmp.eq.f32.partialorder %v248, 8.507059e+37
    %v250 = vand.u32 %v238, 2147483648
    %v251 = vor.u32 1.1754944e-38, %v250
    %v252 = vsel %vm249, %v251, %v247
    %v253 = vmul.f32 1.0, %v252
    %v254 = vsub.f32 %v234, %v80
    %v255 = vmul.f32 %v253, %v254
    %v256 = vadd.f32 %v80, %v255
    %257 = vst [vmem:[#allocation10] sm:$0xf] %v256
    // Predicated region
    $region38: #{tpu_custom_call.1} parent=1 // pred_check
      _
    $region39: #{tpu_custom_call.1} parent=1 // pred_check_branch
      %259 = sbr.rel (0) target = $region41
    $region40: #{tpu_custom_call.1} parent=1 // pred_region
      %261 = vsyncadd [#allocation4], 0
      %s263 = sshll.u32 [#allocation10], 4
      %s264 = int_to_ptr.vmem [resolvable:$true] %s263
      %s265 = sshll.u32 %s5, 4
      %s266 = int_to_ptr.hbm [resolvable:$true] %s265
      %268 = dma.vmem_to_hbm [thread:$0]  %s264, 64, %s266, [#allocation4]
    $region41: #{tpu_custom_call.1} parent=1 // pred_fallthru
      _
    // Predicated region
    $region42: #{tpu_custom_call.1} parent=1 // pred_check
      _
    $region43: #{tpu_custom_call.1} parent=1 // pred_check_branch
      %270 = sbr.rel (0) target = $region45
    $region44: #{tpu_custom_call.1} parent=1 // pred_region
      %272 = dma.done [#allocation4], 64
    $region45: #{tpu_custom_call.1} parent=1 // pred_fallthru
      _
    %273 = vsyncpa [#allocation3], 1
    %274 = vsyncpa [#allocation6], 1
    %275 = vsyncpa [#allocation9], 1
    %276 = vsyncpa [#allocation4], 1

</llo_original>
